<compile_context>
chip_gen: v5e
topology: v5e:2x2
jax: 0.10.0
libtpu: 0.0.40
codegen_flags: <defaults>
</compile_context>

<pallas_src>
import functools

import jax
import jax.numpy as jnp
from jax.experimental import pallas as pl
from jax.experimental.pallas import tpu as pltpu

_LANE = 128


def _round_up(x, m):
    return (x + m - 1) // m * m


def _dqn_kernel(x_ref,
                w1_ref, b1_ref,
                w2_ref, b2_ref,
                w3_ref, b3_ref,
                w4_ref, b4_ref,
                w5_ref, b5_ref,
                o_ref):
    """Whole 5-layer MLP for one batch tile, fully resident in VMEM."""

    def layer(h, w_ref, b_ref, relu):
        w = w_ref[...]
        # Cast MXU operands to the weight dtype (bf16 on v6e/v7x, f32 otherwise);
        # accumulate in f32 and keep bias + ReLU in f32 on the VPU.
        y = jnp.dot(h.astype(w.dtype), w,
                    preferred_element_type=jnp.float32) + b_ref[...]
        if relu:
            y = jnp.maximum(y, 0.0)
        return y

    h = x_ref[...]
    h = layer(h, w1_ref, b1_ref, True)
    h = layer(h, w2_ref, b2_ref, True)
    h = layer(h, w3_ref, b3_ref, True)
    h = layer(h, w4_ref, b4_ref, True)
    h = layer(h, w5_ref, b5_ref, False)
    o_ref[...] = h.astype(o_ref.dtype)


@functools.partial(jax.jit, static_argnames=("block_b", "use_bf16"))
def dqn_forward(x, params, block_b=256, use_bf16=True):
    """x: [B, n_observations] f32; params: (in,out) weights w1..w5, (1,out) biases b1..b5."""
    B, n_obs = x.shape
    n_actions = params["w5"].shape[1]

    # Lane-dense final layer: pad the output dim up to a full 128-lane register.
    n_out_p = _round_up(n_actions, _LANE)
    w5 = jnp.pad(params["w5"], ((0, 0), (0, n_out_p - n_actions)))
    b5 = jnp.pad(params["b5"], ((0, 0), (0, n_out_p - n_actions)))

    # Batch tile: at most block_b rows, at least one full sublane group (8).
    # Tiny batches => single grid step (pure latency path, no per-step overhead).
    bb = min(block_b, _round_up(B, 8))
    grid = (pl.cdiv(B, bb),)

    w_dtype = jnp.bfloat16 if use_bf16 else jnp.float32

    tensors = [params["w1"], params["b1"],
               params["w2"], params["b2"],
               params["w3"], params["b3"],
               params["w4"], params["b4"],
               w5, b5]

    args = [x]
    in_specs = [pl.BlockSpec((bb, n_obs), lambda i: (i, 0))]
    for idx, p in enumerate(tensors):
        if idx % 2 == 0:                      # weights -> MXU operand dtype
            p = p.astype(w_dtype)
        tensors[idx] = p
        # Full-array block, constant index_map: resident in VMEM every step.
        in_specs.append(pl.BlockSpec(p.shape, lambda i: (0, 0)))
    args += tensors

    out_spec = pl.BlockSpec((bb, n_out_p), lambda i: (i, 0))

    flops = 2 * B * (n_obs * 128 + 128 * 256 + 256 * 256 + 256 * 128
                     + 128 * n_out_p)
    bytes_accessed = int(x.size) * 4 + B * n_out_p * 4 + sum(
        int(p.size) * p.dtype.itemsize for p in tensors)

    out = pl.pallas_call(
        _dqn_kernel,
        out_shape=jax.ShapeDtypeStruct((B, n_out_p), jnp.float32),
        grid_spec=pltpu.PrefetchScalarGridSpec(
            num_scalar_prefetch=0,
            grid=grid,
            in_specs=in_specs,
            out_specs=out_spec,
        ),
        compiler_params=pltpu.CompilerParams(
            dimension_semantics=("parallel",),
        ),
        cost_estimate=pl.CostEstimate(
            flops=int(flops), transcendentals=0,
            bytes_accessed=int(bytes_accessed)),
    )(*args)

    return out[:, :n_actions]


def init_dqn_params(key, n_observations, n_actions):
    """Deterministic init matching PyTorch Linear's U(-1/sqrt(fan_in), 1/sqrt(fan_in)).

    Weights are stored pre-transposed as (in, out); biases as (1, out).
    """
    dims = [(n_observations, 128), (128, 256), (256, 256), (256, 128),
            (128, n_actions)]
    params = {}
    for idx, (fan_in, fan_out) in enumerate(dims, start=1):
        key, kw, kb = jax.random.split(key, 3)
        bound = 1.0 / jnp.sqrt(jnp.float32(fan_in))
        params[f"w{idx}"] = jax.random.uniform(
            kw, (fan_in, fan_out), jnp.float32, minval=-bound, maxval=bound)
        params[f"b{idx}"] = jax.random.uniform(
            kb, (1, fan_out), jnp.float32, minval=-bound, maxval=bound)
    return params


if __name__ == "__main__":
    key = jax.random.PRNGKey(0)
    n_observations = 16
    n_actions = 4

    key, kx = jax.random.split(key)
    params = init_dqn_params(key, n_observations, n_actions)

    # Pure-JAX reference.
    def ref(x, p):
        h = x
        for i in range(1, 5):
            h = jnp.maximum(h @ p[f"w{i}"] + p[f"b{i}"], 0.0)
        return h @ p["w5"] + p["b5"]

    # 1) Small inference-style batch (RL action selection): single grid step,
    #    exact f32 operands -> tight tolerance.
    x_small = jax.random.normal(kx, (8, n_observations), jnp.float32)
    out_small = dqn_forward(x_small, params, block_b=256, use_bf16=False)
    jax.block_until_ready(out_small)
    assert out_small.shape == (8, n_actions)
    assert jnp.allclose(out_small, ref(x_small, params), atol=1e-5, rtol=1e-5)

    # 2) Training-size batch: 256-row tiles, 2 parallel grid steps (both v7x
    #    TensorCores), bf16 MXU operands with f32 accumulation -> loose tol.
    key, kx2 = jax.random.split(key)
    x_big = jax.random.normal(kx2, (512, n_observations), jnp.float32)
    out_big = dqn_forward(x_big, params, block_b=256, use_bf16=True)
    jax.block_until_ready(out_big)
    assert out_big.shape == (512, n_actions)
    assert jnp.allclose(out_big, ref(x_big, params), atol=3e-2, rtol=3e-2)

    print("KERNEL_OK")
</pallas_src>

<mosaic_0001>
module attributes {stable_mosaic.version = 11 : i64} {
  func.func @_dqn_kernel(%arg0: i32, %arg1: memref<8x16xf32, #tpu.memory_space<vmem>>, %arg2: memref<16x128xf32, #tpu.memory_space<vmem>>, %arg3: memref<1x128xf32, #tpu.memory_space<vmem>>, %arg4: memref<128x256xf32, #tpu.memory_space<vmem>>, %arg5: memref<1x256xf32, #tpu.memory_space<vmem>>, %arg6: memref<256x256xf32, #tpu.memory_space<vmem>>, %arg7: memref<1x256xf32, #tpu.memory_space<vmem>>, %arg8: memref<256x128xf32, #tpu.memory_space<vmem>>, %arg9: memref<1x128xf32, #tpu.memory_space<vmem>>, %arg10: memref<128x128xf32, #tpu.memory_space<vmem>>, %arg11: memref<1x128xf32, #tpu.memory_space<vmem>>, %arg12: memref<8x128xf32, #tpu.memory_space<vmem>>) attributes {dimension_semantics = [#tpu.dimension_semantics<parallel>], iteration_bounds = array<i64: 1>, scalar_prefetch = 0 : i64, scratch_operands = 0 : i64, tpu.core_type = #tpu.core_type<tc>, window_params = [{transform_indices = @transform_0, window_bounds = array<i64: 8, 16>}, {pipeline_mode = #tpu.pipeline_mode<synchronous>, transform_indices = @transform_1, window_bounds = array<i64: 16, 128>}, {pipeline_mode = #tpu.pipeline_mode<synchronous>, transform_indices = @transform_2, window_bounds = array<i64: 1, 128>}, {pipeline_mode = #tpu.pipeline_mode<synchronous>, transform_indices = @transform_3, window_bounds = array<i64: 128, 256>}, {pipeline_mode = #tpu.pipeline_mode<synchronous>, transform_indices = @transform_4, window_bounds = array<i64: 1, 256>}, {pipeline_mode = #tpu.pipeline_mode<synchronous>, transform_indices = @transform_5, window_bounds = array<i64: 256, 256>}, {pipeline_mode = #tpu.pipeline_mode<synchronous>, transform_indices = @transform_6, window_bounds = array<i64: 1, 256>}, {pipeline_mode = #tpu.pipeline_mode<synchronous>, transform_indices = @transform_7, window_bounds = array<i64: 256, 128>}, {pipeline_mode = #tpu.pipeline_mode<synchronous>, transform_indices = @transform_8, window_bounds = array<i64: 1, 128>}, {pipeline_mode = #tpu.pipeline_mode<synchronous>, transform_indices = @transform_9, window_bounds = array<i64: 128, 128>}, {pipeline_mode = #tpu.pipeline_mode<synchronous>, transform_indices = @transform_10, window_bounds = array<i64: 1, 128>}, {transform_indices = @transform_11, window_bounds = array<i64: 8, 128>}]} {
    %c0 = arith.constant 0 : index
    %c0_0 = arith.constant 0 : index
    %0 = vector.load %arg1[%c0, %c0_0] : memref<8x16xf32, #tpu.memory_space<vmem>>, vector<8x16xf32>
    %c0_1 = arith.constant 0 : index
    %c0_2 = arith.constant 0 : index
    %1 = vector.load %arg2[%c0_1, %c0_2] : memref<16x128xf32, #tpu.memory_space<vmem>>, vector<16x128xf32>
    %cst = arith.constant dense<0.000000e+00> : vector<8x128xf32>
    %2 = tpu.matmul %0, %1, %cst {dimension_numbers = #tpu.dot_dimension_numbers<[1], [0], [0], [1], [0, 0, 1, 1], [], []>} : vector<8x16xf32>, vector<16x128xf32>, vector<8x128xf32> -> vector<8x128xf32>
    %c0_3 = arith.constant 0 : index
    %c0_4 = arith.constant 0 : index
    %3 = vector.load %arg3[%c0_3, %c0_4] : memref<1x128xf32, #tpu.memory_space<vmem>>, vector<1x128xf32>
    %4 = vector.broadcast %3 : vector<1x128xf32> to vector<8x128xf32>
    %5 = arith.addf %2, %4 : vector<8x128xf32>
    %cst_5 = arith.constant 0.000000e+00 : f32
    %6 = vector.broadcast %cst_5 : f32 to vector<8x128xf32>
    %7 = arith.maximumf %5, %6 : vector<8x128xf32>
    %c0_6 = arith.constant 0 : index
    %c0_7 = arith.constant 0 : index
    %8 = vector.load %arg4[%c0_6, %c0_7] : memref<128x256xf32, #tpu.memory_space<vmem>>, vector<128x256xf32>
    %cst_8 = arith.constant dense<0.000000e+00> : vector<8x256xf32>
    %9 = tpu.matmul %7, %8, %cst_8 {dimension_numbers = #tpu.dot_dimension_numbers<[1], [0], [0], [1], [0, 0, 1, 1], [], []>} : vector<8x128xf32>, vector<128x256xf32>, vector<8x256xf32> -> vector<8x256xf32>
    %c0_9 = arith.constant 0 : index
    %c0_10 = arith.constant 0 : index
    %10 = vector.load %arg5[%c0_9, %c0_10] : memref<1x256xf32, #tpu.memory_space<vmem>>, vector<1x256xf32>
    %11 = vector.broadcast %10 : vector<1x256xf32> to vector<8x256xf32>
    %12 = arith.addf %9, %11 : vector<8x256xf32>
    %cst_11 = arith.constant 0.000000e+00 : f32
    %13 = vector.broadcast %cst_11 : f32 to vector<8x256xf32>
    %14 = arith.maximumf %12, %13 : vector<8x256xf32>
    %c0_12 = arith.constant 0 : index
    %c0_13 = arith.constant 0 : index
    %15 = vector.load %arg6[%c0_12, %c0_13] : memref<256x256xf32, #tpu.memory_space<vmem>>, vector<256x256xf32>
    %cst_14 = arith.constant dense<0.000000e+00> : vector<8x256xf32>
    %16 = tpu.matmul %14, %15, %cst_14 {dimension_numbers = #tpu.dot_dimension_numbers<[1], [0], [0], [1], [0, 0, 1, 1], [], []>} : vector<8x256xf32>, vector<256x256xf32>, vector<8x256xf32> -> vector<8x256xf32>
    %c0_15 = arith.constant 0 : index
    %c0_16 = arith.constant 0 : index
    %17 = vector.load %arg7[%c0_15, %c0_16] : memref<1x256xf32, #tpu.memory_space<vmem>>, vector<1x256xf32>
    %18 = vector.broadcast %17 : vector<1x256xf32> to vector<8x256xf32>
    %19 = arith.addf %16, %18 : vector<8x256xf32>
    %cst_17 = arith.constant 0.000000e+00 : f32
    %20 = vector.broadcast %cst_17 : f32 to vector<8x256xf32>
    %21 = arith.maximumf %19, %20 : vector<8x256xf32>
    %c0_18 = arith.constant 0 : index
    %c0_19 = arith.constant 0 : index
    %22 = vector.load %arg8[%c0_18, %c0_19] : memref<256x128xf32, #tpu.memory_space<vmem>>, vector<256x128xf32>
    %cst_20 = arith.constant dense<0.000000e+00> : vector<8x128xf32>
    %23 = tpu.matmul %21, %22, %cst_20 {dimension_numbers = #tpu.dot_dimension_numbers<[1], [0], [0], [1], [0, 0, 1, 1], [], []>} : vector<8x256xf32>, vector<256x128xf32>, vector<8x128xf32> -> vector<8x128xf32>
    %c0_21 = arith.constant 0 : index
    %c0_22 = arith.constant 0 : index
    %24 = vector.load %arg9[%c0_21, %c0_22] : memref<1x128xf32, #tpu.memory_space<vmem>>, vector<1x128xf32>
    %25 = vector.broadcast %24 : vector<1x128xf32> to vector<8x128xf32>
    %26 = arith.addf %23, %25 : vector<8x128xf32>
    %cst_23 = arith.constant 0.000000e+00 : f32
    %27 = vector.broadcast %cst_23 : f32 to vector<8x128xf32>
    %28 = arith.maximumf %26, %27 : vector<8x128xf32>
    %c0_24 = arith.constant 0 : index
    %c0_25 = arith.constant 0 : index
    %29 = vector.load %arg10[%c0_24, %c0_25] : memref<128x128xf32, #tpu.memory_space<vmem>>, vector<128x128xf32>
    %cst_26 = arith.constant dense<0.000000e+00> : vector<8x128xf32>
    %30 = tpu.matmul %28, %29, %cst_26 {dimension_numbers = #tpu.dot_dimension_numbers<[1], [0], [0], [1], [0, 0, 1, 1], [], []>} : vector<8x128xf32>, vector<128x128xf32>, vector<8x128xf32> -> vector<8x128xf32>
    %c0_27 = arith.constant 0 : index
    %c0_28 = arith.constant 0 : index
    %31 = vector.load %arg11[%c0_27, %c0_28] : memref<1x128xf32, #tpu.memory_space<vmem>>, vector<1x128xf32>
    %32 = vector.broadcast %31 : vector<1x128xf32> to vector<8x128xf32>
    %33 = arith.addf %30, %32 : vector<8x128xf32>
    %c0_29 = arith.constant 0 : index
    %c0_30 = arith.constant 0 : index
    %34 = vector.load %arg12[%c0_29, %c0_30] : memref<8x128xf32, #tpu.memory_space<vmem>>, vector<8x128xf32>
    tpu.vector_store %arg12[%c0_29, %c0_30], %33 {strides = array<i32>} : memref<8x128xf32, #tpu.memory_space<vmem>>, vector<8x128xf32>,
    return
  }
  func.func @transform_0(%arg0: i32) -> (i32, i32) {
    %c0_i32 = arith.constant 0 : i32
    %c0_i32_0 = arith.constant 0 : i32
    return %arg0, %c0_i32 : i32, i32
  }
  func.func @transform_1(%arg0: i32) -> (i32, i32) {
    %c0_i32 = arith.constant 0 : i32
    %c0_i32_0 = arith.constant 0 : i32
    %c0_i32_1 = arith.constant 0 : i32
    return %c0_i32, %c0_i32_0 : i32, i32
  }
  func.func @transform_2(%arg0: i32) -> (i32, i32) {
    %c0_i32 = arith.constant 0 : i32
    %c0_i32_0 = arith.constant 0 : i32
    %c0_i32_1 = arith.constant 0 : i32
    return %c0_i32, %c0_i32_0 : i32, i32
  }
  func.func @transform_3(%arg0: i32) -> (i32, i32) {
    %c0_i32 = arith.constant 0 : i32
    %c0_i32_0 = arith.constant 0 : i32
    %c0_i32_1 = arith.constant 0 : i32
    return %c0_i32, %c0_i32_0 : i32, i32
  }
  func.func @transform_4(%arg0: i32) -> (i32, i32) {
    %c0_i32 = arith.constant 0 : i32
    %c0_i32_0 = arith.constant 0 : i32
    %c0_i32_1 = arith.constant 0 : i32
    return %c0_i32, %c0_i32_0 : i32, i32
  }
  func.func @transform_5(%arg0: i32) -> (i32, i32) {
    %c0_i32 = arith.constant 0 : i32
    %c0_i32_0 = arith.constant 0 : i32
    %c0_i32_1 = arith.constant 0 : i32
    return %c0_i32, %c0_i32_0 : i32, i32
  }
  func.func @transform_6(%arg0: i32) -> (i32, i32) {
    %c0_i32 = arith.constant 0 : i32
    %c0_i32_0 = arith.constant 0 : i32
    %c0_i32_1 = arith.constant 0 : i32
    return %c0_i32, %c0_i32_0 : i32, i32
  }
  func.func @transform_7(%arg0: i32) -> (i32, i32) {
    %c0_i32 = arith.constant 0 : i32
    %c0_i32_0 = arith.constant 0 : i32
    %c0_i32_1 = arith.constant 0 : i32
    return %c0_i32, %c0_i32_0 : i32, i32
  }
  func.func @transform_8(%arg0: i32) -> (i32, i32) {
    %c0_i32 = arith.constant 0 : i32
    %c0_i32_0 = arith.constant 0 : i32
    %c0_i32_1 = arith.constant 0 : i32
    return %c0_i32, %c0_i32_0 : i32, i32
  }
  func.func @transform_9(%arg0: i32) -> (i32, i32) {
    %c0_i32 = arith.constant 0 : i32
    %c0_i32_0 = arith.constant 0 : i32
    %c0_i32_1 = arith.constant 0 : i32
    return %c0_i32, %c0_i32_0 : i32, i32
  }
  func.func @transform_10(%arg0: i32) -> (i32, i32) {
    %c0_i32 = arith.constant 0 : i32
    %c0_i32_0 = arith.constant 0 : i32
    %c0_i32_1 = arith.constant 0 : i32
    return %c0_i32, %c0_i32_0 : i32, i32
  }
  func.func @transform_11(%arg0: i32) -> (i32, i32) {
    %c0_i32 = arith.constant 0 : i32
    %c0_i32_0 = arith.constant 0 : i32
    return %arg0, %c0_i32 : i32, i32
  }
}

</mosaic_0001>

<llo_original>
// kernel: dqn_forward.1
$region0: #{dqn_forward.1}
  #allocation0 [shape = 'u32[]', space=smem, size = 0x4, offset = 0x4, fixed_abs, tag = 'smem constant byte address 0x4 - core index']
  #allocation1 [shape = 'u32[72,128]{1,0:T(1,128)}', space=vmem, size = 0x9000, scoped, tag = 'internal scratch']
  %s0 = inlined_call_operand.vmem [shape: f32[8,16], index: 0, kind: input, shape index: {}]
  %s1 = inlined_call_operand.vmem [shape: f32[16,128], index: 1, kind: input, shape index: {}]
  %s2 = inlined_call_operand.vmem [shape: f32[1,128], index: 2, kind: input, shape index: {}]
  %s3 = inlined_call_operand.vmem [shape: f32[128,256], index: 3, kind: input, shape index: {}]
  %s4 = inlined_call_operand.vmem [shape: f32[1,256], index: 4, kind: input, shape index: {}]
  %s5 = inlined_call_operand.hbm [shape: f32[256,256], index: 5, kind: input, shape index: {}]
  %s6 = inlined_call_operand.vmem [shape: f32[1,256], index: 6, kind: input, shape index: {}]
  %s7 = inlined_call_operand.hbm [shape: f32[256,128], index: 7, kind: input, shape index: {}]
  %s8 = inlined_call_operand.vmem [shape: f32[1,128], index: 8, kind: input, shape index: {}]
  %s9 = inlined_call_operand.vmem [shape: f32[128,128], index: 9, kind: input, shape index: {}]
  %s10 = inlined_call_operand.vmem [shape: f32[1,128], index: 10, kind: input, shape index: {}]
  %s11 = inlined_call_operand.vmem [shape: f32[8,128], index: 11, kind: output, shape index: {}]
  %s12 = sld [smem:[#allocation0]]
  $region62: #{dqn_forward.1} parent=0
    _
  %s14 = ssub.s32 1, %s12
  %s15 = scalar_select 0, %s14, %s12
  $region1: #{dqn_forward.1} parent=0
    #allocation2 [shape = 'u8[262144]{0}', space=vmem, size = 0x40000, scoped, tag = 'input window, operand 5, single buffered']
    #allocation3 [shape = 's32[1]{0}', space=sflag, size = 0x4, scoped, tag = 'scoped memory for dqn_forward.1']
    #allocation4 [shape = 'u8[131072]{0}', space=vmem, size = 0x20000, scoped, tag = 'input window, operand 7, single buffered']
    #allocation5 [shape = 's32[1]{0}', space=sflag, size = 0x4, scoped, tag = 'scoped memory for dqn_forward.1']
    %16 = vsyncpa [#allocation3], 0
    %17 = vsyncpa [#allocation5], 0
    // Predicated region
    $region2: #{dqn_forward.1} parent=1 // pred_check
      _
    $region3: #{dqn_forward.1} parent=1 // pred_check_branch
      %19 = sbr.rel (0) target = $region5
    $region4: #{dqn_forward.1} parent=1 // pred_region
      _
    $region5: #{dqn_forward.1} parent=1 // pred_fallthru
      _
    // Predicated region
    $region6: #{dqn_forward.1} parent=1 // pred_check
      _
    $region7: #{dqn_forward.1} parent=1 // pred_check_branch
      %21 = sbr.rel (0) target = $region9
    $region8: #{dqn_forward.1} parent=1 // pred_region
      _
    $region9: #{dqn_forward.1} parent=1 // pred_fallthru
      _
    // Predicated region
    $region10: #{dqn_forward.1} parent=1 // pred_check
      _
    $region11: #{dqn_forward.1} parent=1 // pred_check_branch
      %23 = sbr.rel (0) target = $region13
    $region12: #{dqn_forward.1} parent=1 // pred_region
      _
    $region13: #{dqn_forward.1} parent=1 // pred_fallthru
      _
    // Predicated region
    $region14: #{dqn_forward.1} parent=1 // pred_check
      _
    $region15: #{dqn_forward.1} parent=1 // pred_check_branch
      %25 = sbr.rel (0) target = $region17
    $region16: #{dqn_forward.1} parent=1 // pred_region
      _
    $region17: #{dqn_forward.1} parent=1 // pred_fallthru
      _
    // Predicated region
    $region18: #{dqn_forward.1} parent=1 // pred_check
      _
    $region19: #{dqn_forward.1} parent=1 // pred_check_branch
      %27 = sbr.rel (0) target = $region21
    $region20: #{dqn_forward.1} parent=1 // pred_region
      _
    $region21: #{dqn_forward.1} parent=1 // pred_fallthru
      _
    // Predicated region
    $region22: #{dqn_forward.1} parent=1 // pred_check
      _
    $region23: #{dqn_forward.1} parent=1 // pred_check_branch
      %29 = sbr.rel (0) target = $region25
    $region24: #{dqn_forward.1} parent=1 // pred_region
      %31 = vsyncadd [#allocation3], 0
      %s32 = sshll.u32 %s5, 4
      %s33 = int_to_ptr.hbm [resolvable:$true] %s32
      %s34 = sshll.u32 [#allocation2], 4
      %s35 = int_to_ptr.vmem [resolvable:$true] %s34
      %40 = dma.hbm_to_vmem [thread:$0]  %s33, 8192, %s35, [#allocation3], 256, 256, 16
    $region25: #{dqn_forward.1} parent=1 // pred_fallthru
      _
    // Predicated region
    $region26: #{dqn_forward.1} parent=1 // pred_check
      _
    $region27: #{dqn_forward.1} parent=1 // pred_check_branch
      %42 = sbr.rel (0) target = $region29
    $region28: #{dqn_forward.1} parent=1 // pred_region
      _
    $region29: #{dqn_forward.1} parent=1 // pred_fallthru
      _
    // Predicated region
    $region30: #{dqn_forward.1} parent=1 // pred_check
      _
    $region31: #{dqn_forward.1} parent=1 // pred_check_branch
      %44 = sbr.rel (0) target = $region33
    $region32: #{dqn_forward.1} parent=1 // pred_region
      %46 = vsyncadd [#allocation5], 0
      %s47 = sshll.u32 %s7, 4
      %s48 = int_to_ptr.hbm [resolvable:$true] %s47
      %s49 = sshll.u32 [#allocation4], 4
      %s50 = int_to_ptr.vmem [resolvable:$true] %s49
      %55 = dma.hbm_to_vmem [thread:$0]  %s48, 4096, %s50, [#allocation5], 128, 128, 8
    $region33: #{dqn_forward.1} parent=1 // pred_fallthru
      _
    // Predicated region
    $region34: #{dqn_forward.1} parent=1 // pred_check
      _
    $region35: #{dqn_forward.1} parent=1 // pred_check_branch
      %57 = sbr.rel (0) target = $region37
    $region36: #{dqn_forward.1} parent=1 // pred_region
      _
    $region37: #{dqn_forward.1} parent=1 // pred_fallthru
      _
    // Predicated region
    $region38: #{dqn_forward.1} parent=1 // pred_check
      _
    $region39: #{dqn_forward.1} parent=1 // pred_check_branch
      %59 = sbr.rel (0) target = $region41
    $region40: #{dqn_forward.1} parent=1 // pred_region
      _
    $region41: #{dqn_forward.1} parent=1 // pred_fallthru
      _
    // Predicated region
    $region42: #{dqn_forward.1} parent=1 // pred_check
      _
    $region43: #{dqn_forward.1} parent=1 // pred_check_branch
      %61 = sbr.rel (0) target = $region45
    $region44: #{dqn_forward.1} parent=1 // pred_region
      _
    $region45: #{dqn_forward.1} parent=1 // pred_fallthru
      _
    // Predicated region
    $region46: #{dqn_forward.1} parent=1 // pred_check
      _
    $region47: #{dqn_forward.1} parent=1 // pred_check_branch
      %63 = sbr.rel (0) target = $region49
    $region48: #{dqn_forward.1} parent=1 // pred_region
      %65 = dma.done [#allocation3], 8192
    $region49: #{dqn_forward.1} parent=1 // pred_fallthru
      _
    // Predicated region
    $region50: #{dqn_forward.1} parent=1 // pred_check
      _
    $region51: #{dqn_forward.1} parent=1 // pred_check_branch
      %67 = sbr.rel (0) target = $region53
    $region52: #{dqn_forward.1} parent=1 // pred_region
      %69 = dma.done [#allocation5], 4096
    $region53: #{dqn_forward.1} parent=1 // pred_fallthru
      _
    %v70 = vld [vmem:[%s0] sm:$0xff]
    %v71 = vld [vmem:[%s1] sm:$0xff]
    %v72 = vld [vmem:[%s1 + $0x8] sm:$0xff]
    %v73 = vld [vmem:[%s2] sm:$0x1]
    %v75 = vperm.slane %v73, 0
    %vm77 = vcmask 130048
    %v79 = vsel %vm77, %v70, 0
    %81 = vmatpush.msra.mxu0 0.0
    %82 = vmatpush.msra.mxu0 0.0
    %83 = vmatpush.msra.mxu0 0.0
    %84 = vmatpush.msra.mxu0 0.0
    %85 = vmatpush.msra.mxu0 0.0
    %86 = vmatpush.msra.mxu0 0.0
    %87 = vmatpush.msra.mxu0 0.0
    %88 = vmatpush.msra.mxu0 0.0
    %89 = vmatpush.msra.mxu0 0.0
    %90 = vmatpush.msra.mxu0 0.0
    %91 = vmatpush.msra.mxu0 0.0
    %92 = vmatpush.msra.mxu0 0.0
    %93 = vmatpush.msra.mxu0 0.0
    %94 = vmatpush.msra.mxu0 0.0
    %95 = vmatpush.msra.mxu0 %v72
    %96 = vmatpush.msra.mxu0 %v71
    %97 = vmatmul.f32.gmra.mxu0 %v79
    %v98 = vpop.f32.mrf.mxu0
    %v99 = vadd.f32 %v75, %v98
    %100 = vdwg.mxu0
    %v101 = vmax.f32 %v99, 0.0
    %v102 = vld [vmem:[%s3] sm:$0xff]
    %v103 = vld [vmem:[%s3 + $0x8] sm:$0xff]
    %v104 = vld [vmem:[%s3 + $0x10] sm:$0xff]
    %v105 = vld [vmem:[%s3 + $0x18] sm:$0xff]
    %v106 = vld [vmem:[%s3 + $0x20] sm:$0xff]
    %v107 = vld [vmem:[%s3 + $0x28] sm:$0xff]
    %v108 = vld [vmem:[%s3 + $0x30] sm:$0xff]
    %v109 = vld [vmem:[%s3 + $0x38] sm:$0xff]
    %v110 = vld [vmem:[%s3 + $0x40] sm:$0xff]
    %v111 = vld [vmem:[%s3 + $0x48] sm:$0xff]
    %v112 = vld [vmem:[%s3 + $0x50] sm:$0xff]
    %v113 = vld [vmem:[%s3 + $0x58] sm:$0xff]
    %v114 = vld [vmem:[%s3 + $0x60] sm:$0xff]
    %v115 = vld [vmem:[%s3 + $0x68] sm:$0xff]
    %v116 = vld [vmem:[%s3 + $0x70] sm:$0xff]
    %v117 = vld [vmem:[%s3 + $0x78] sm:$0xff]
    %v118 = vld [vmem:[%s3 + $0x80] sm:$0xff]
    %v119 = vld [vmem:[%s3 + $0x88] sm:$0xff]
    %v120 = vld [vmem:[%s3 + $0x90] sm:$0xff]
    %v121 = vld [vmem:[%s3 + $0x98] sm:$0xff]
    %v122 = vld [vmem:[%s3 + $0xa0] sm:$0xff]
    %v123 = vld [vmem:[%s3 + $0xa8] sm:$0xff]
    %v124 = vld [vmem:[%s3 + $0xb0] sm:$0xff]
    %v125 = vld [vmem:[%s3 + $0xb8] sm:$0xff]
    %v126 = vld [vmem:[%s3 + $0xc0] sm:$0xff]
    %v127 = vld [vmem:[%s3 + $0xc8] sm:$0xff]
    %v128 = vld [vmem:[%s3 + $0xd0] sm:$0xff]
    %v129 = vld [vmem:[%s3 + $0xd8] sm:$0xff]
    %v130 = vld [vmem:[%s3 + $0xe0] sm:$0xff]
    %v131 = vld [vmem:[%s3 + $0xe8] sm:$0xff]
    %v132 = vld [vmem:[%s3 + $0xf0] sm:$0xff]
    %v133 = vld [vmem:[%s3 + $0xf8] sm:$0xff]
    %v134 = vld [vmem:[%s4] sm:$0x3]
    %v136 = vperm.slane %v134, 0
    %v137 = vperm.slane %v134, 1
    %140 = vmatpush.msra.mxu0 %v132
    %141 = vmatpush.msra.mxu0 %v130
    %142 = vmatpush.msra.mxu0 %v128
    %143 = vmatpush.msra.mxu0 %v126
    %144 = vmatpush.msra.mxu0 %v124
    %145 = vmatpush.msra.mxu0 %v122
    %146 = vmatpush.msra.mxu0 %v120
    %147 = vmatpush.msra.mxu0 %v118
    %148 = vmatpush.msra.mxu0 %v116
    %149 = vmatpush.msra.mxu0 %v114
    %150 = vmatpush.msra.mxu0 %v112
    %151 = vmatpush.msra.mxu0 %v110
    %152 = vmatpush.msra.mxu0 %v108
    %153 = vmatpush.msra.mxu0 %v106
    %154 = vmatpush.msra.mxu0 %v104
    %155 = vmatpush.msra.mxu0 %v102
    %156 = vmatmul.f32.gmra.mxu0 %v101
    %v157 = vpop.f32.mrf.mxu0
    %v158 = vadd.f32 %v136, %v157
    %159 = vdwg.mxu0
    %160 = vmatpush.msra.mxu0 %v133
    %161 = vmatpush.msra.mxu0 %v131
    %162 = vmatpush.msra.mxu0 %v129
    %163 = vmatpush.msra.mxu0 %v127
    %164 = vmatpush.msra.mxu0 %v125
    %165 = vmatpush.msra.mxu0 %v123
    %166 = vmatpush.msra.mxu0 %v121
    %167 = vmatpush.msra.mxu0 %v119
    %168 = vmatpush.msra.mxu0 %v117
    %169 = vmatpush.msra.mxu0 %v115
    %170 = vmatpush.msra.mxu0 %v113
    %171 = vmatpush.msra.mxu0 %v111
    %172 = vmatpush.msra.mxu0 %v109
    %173 = vmatpush.msra.mxu0 %v107
    %174 = vmatpush.msra.mxu0 %v105
    %175 = vmatpush.msra.mxu0 %v103
    %176 = vmatmul.f32.gmra.mxu0 %v101
    %v177 = vpop.f32.mrf.mxu0
    %v178 = vadd.f32 %v137, %v177
    %179 = vdwg.mxu0
    %v180 = vmax.f32 %v158, 0.0
    %v181 = vmax.f32 %v178, 0.0
    %v182 = vld [vmem:[#allocation2] sm:$0xff]
    %v183 = vld [vmem:[#allocation2 + $0x8] sm:$0xff]
    %v184 = vld [vmem:[#allocation2 + $0x10] sm:$0xff]
    %v185 = vld [vmem:[#allocation2 + $0x18] sm:$0xff]
    %v186 = vld [vmem:[#allocation2 + $0x20] sm:$0xff]
    %v187 = vld [vmem:[#allocation2 + $0x28] sm:$0xff]
    %v188 = vld [vmem:[#allocation2 + $0x30] sm:$0xff]
    %v189 = vld [vmem:[#allocation2 + $0x38] sm:$0xff]
    %v190 = vld [vmem:[#allocation2 + $0x40] sm:$0xff]
    %v191 = vld [vmem:[#allocation2 + $0x48] sm:$0xff]
    %v192 = vld [vmem:[#allocation2 + $0x50] sm:$0xff]
    %v193 = vld [vmem:[#allocation2 + $0x58] sm:$0xff]
    %v194 = vld [vmem:[#allocation2 + $0x60] sm:$0xff]
    %v195 = vld [vmem:[#allocation2 + $0x68] sm:$0xff]
    %v196 = vld [vmem:[#allocation2 + $0x70] sm:$0xff]
    %v197 = vld [vmem:[#allocation2 + $0x78] sm:$0xff]
    %v198 = vld [vmem:[#allocation2 + $0x80] sm:$0xff]
    %v199 = vld [vmem:[#allocation2 + $0x88] sm:$0xff]
    %v200 = vld [vmem:[#allocation2 + $0x90] sm:$0xff]
    %v201 = vld [vmem:[#allocation2 + $0x98] sm:$0xff]
    %v202 = vld [vmem:[#allocation2 + $0xa0] sm:$0xff]
    %v203 = vld [vmem:[#allocation2 + $0xa8] sm:$0xff]
    %v204 = vld [vmem:[#allocation2 + $0xb0] sm:$0xff]
    %v205 = vld [vmem:[#allocation2 + $0xb8] sm:$0xff]
    %v206 = vld [vmem:[#allocation2 + $0xc0] sm:$0xff]
    %v207 = vld [vmem:[#allocation2 + $0xc8] sm:$0xff]
    %v208 = vld [vmem:[#allocation2 + $0xd0] sm:$0xff]
    %v209 = vld [vmem:[#allocation2 + $0xd8] sm:$0xff]
    %v210 = vld [vmem:[#allocation2 + $0xe0] sm:$0xff]
    %v211 = vld [vmem:[#allocation2 + $0xe8] sm:$0xff]
    %v212 = vld [vmem:[#allocation2 + $0xf0] sm:$0xff]
    %v213 = vld [vmem:[#allocation2 + $0xf8] sm:$0xff]
    %v214 = vld [vmem:[#allocation2 + $0x100] sm:$0xff]
    %v215 = vld [vmem:[#allocation2 + $0x108] sm:$0xff]
    %v216 = vld [vmem:[#allocation2 + $0x110] sm:$0xff]
    %v217 = vld [vmem:[#allocation2 + $0x118] sm:$0xff]
    %v218 = vld [vmem:[#allocation2 + $0x120] sm:$0xff]
    %v219 = vld [vmem:[#allocation2 + $0x128] sm:$0xff]
    %v220 = vld [vmem:[#allocation2 + $0x130] sm:$0xff]
    %v221 = vld [vmem:[#allocation2 + $0x138] sm:$0xff]
    %v222 = vld [vmem:[#allocation2 + $0x140] sm:$0xff]
    %v223 = vld [vmem:[#allocation2 + $0x148] sm:$0xff]
    %v224 = vld [vmem:[#allocation2 + $0x150] sm:$0xff]
    %v225 = vld [vmem:[#allocation2 + $0x158] sm:$0xff]
    %v226 = vld [vmem:[#allocation2 + $0x160] sm:$0xff]
    %v227 = vld [vmem:[#allocation2 + $0x168] sm:$0xff]
    %v228 = vld [vmem:[#allocation2 + $0x170] sm:$0xff]
    %v229 = vld [vmem:[#allocation2 + $0x178] sm:$0xff]
    %v230 = vld [vmem:[#allocation2 + $0x180] sm:$0xff]
    %v231 = vld [vmem:[#allocation2 + $0x188] sm:$0xff]
    %v232 = vld [vmem:[#allocation2 + $0x190] sm:$0xff]
    %v233 = vld [vmem:[#allocation2 + $0x198] sm:$0xff]
    %v234 = vld [vmem:[#allocation2 + $0x1a0] sm:$0xff]
    %v235 = vld [vmem:[#allocation2 + $0x1a8] sm:$0xff]
    %v236 = vld [vmem:[#allocation2 + $0x1b0] sm:$0xff]
    %v237 = vld [vmem:[#allocation2 + $0x1b8] sm:$0xff]
    %v238 = vld [vmem:[#allocation2 + $0x1c0] sm:$0xff]
    %v239 = vld [vmem:[#allocation2 + $0x1c8] sm:$0xff]
    %v240 = vld [vmem:[#allocation2 + $0x1d0] sm:$0xff]
    %v241 = vld [vmem:[#allocation2 + $0x1d8] sm:$0xff]
    %v242 = vld [vmem:[#allocation2 + $0x1e0] sm:$0xff]
    %v243 = vld [vmem:[#allocation2 + $0x1e8] sm:$0xff]
    %v244 = vld [vmem:[#allocation2 + $0x1f0] sm:$0xff]
    %v245 = vld [vmem:[#allocation2 + $0x1f8] sm:$0xff]
    %v246 = vld [vmem:[%s6] sm:$0x3]
    %v248 = vperm.slane %v246, 0
    %v249 = vperm.slane %v246, 1
    %252 = vmatpush.msra.mxu0 %v212
    %253 = vmatpush.msra.mxu0 %v210
    %254 = vmatpush.msra.mxu0 %v208
    %255 = vmatpush.msra.mxu0 %v206
    %256 = vmatpush.msra.mxu0 %v204
    %257 = vmatpush.msra.mxu0 %v202
    %258 = vmatpush.msra.mxu0 %v200
    %259 = vmatpush.msra.mxu0 %v198
    %260 = vmatpush.msra.mxu0 %v196
    %261 = vmatpush.msra.mxu0 %v194
    %262 = vmatpush.msra.mxu0 %v192
    %263 = vmatpush.msra.mxu0 %v190
    %264 = vmatpush.msra.mxu0 %v188
    %265 = vmatpush.msra.mxu0 %v186
    %266 = vmatpush.msra.mxu0 %v184
    %267 = vmatpush.msra.mxu0 %v182
    %268 = vmatmul.f32.gmra.mxu0 %v180
    %v269 = vpop.f32.mrf.mxu0
    %v270 = vadd.f32 %v248, %v269
    %271 = vdwg.mxu0
    %272 = vmatpush.msra.mxu0 %v244
    %273 = vmatpush.msra.mxu0 %v242
    %274 = vmatpush.msra.mxu0 %v240
    %275 = vmatpush.msra.mxu0 %v238
    %276 = vmatpush.msra.mxu0 %v236
    %277 = vmatpush.msra.mxu0 %v234
    %278 = vmatpush.msra.mxu0 %v232
    %279 = vmatpush.msra.mxu0 %v230
    %280 = vmatpush.msra.mxu0 %v228
    %281 = vmatpush.msra.mxu0 %v226
    %282 = vmatpush.msra.mxu0 %v224
    %283 = vmatpush.msra.mxu0 %v222
    %284 = vmatpush.msra.mxu0 %v220
    %285 = vmatpush.msra.mxu0 %v218
    %286 = vmatpush.msra.mxu0 %v216
    %287 = vmatpush.msra.mxu0 %v214
    %288 = vmatmul.f32.gmra.mxu0 %v181
    %v289 = vpop.f32.mrf.mxu0
    %v290 = vadd.f32 %v270, %v289
    %291 = vdwg.mxu0
    %292 = vmatpush.msra.mxu0 %v213
    %293 = vmatpush.msra.mxu0 %v211
    %294 = vmatpush.msra.mxu0 %v209
    %295 = vmatpush.msra.mxu0 %v207
    %296 = vmatpush.msra.mxu0 %v205
    %297 = vmatpush.msra.mxu0 %v203
    %298 = vmatpush.msra.mxu0 %v201
    %299 = vmatpush.msra.mxu0 %v199
    %300 = vmatpush.msra.mxu0 %v197
    %301 = vmatpush.msra.mxu0 %v195
    %302 = vmatpush.msra.mxu0 %v193
    %303 = vmatpush.msra.mxu0 %v191
    %304 = vmatpush.msra.mxu0 %v189
    %305 = vmatpush.msra.mxu0 %v187
    %306 = vmatpush.msra.mxu0 %v185
    %307 = vmatpush.msra.mxu0 %v183
    %308 = vmatmul.f32.gmra.mxu0 %v180
    %v309 = vpop.f32.mrf.mxu0
    %v310 = vadd.f32 %v249, %v309
    %311 = vdwg.mxu0
    %312 = vmatpush.msra.mxu0 %v245
    %313 = vmatpush.msra.mxu0 %v243
    %314 = vmatpush.msra.mxu0 %v241
    %315 = vmatpush.msra.mxu0 %v239
    %316 = vmatpush.msra.mxu0 %v237
    %317 = vmatpush.msra.mxu0 %v235
    %318 = vmatpush.msra.mxu0 %v233
    %319 = vmatpush.msra.mxu0 %v231
    %320 = vmatpush.msra.mxu0 %v229
    %321 = vmatpush.msra.mxu0 %v227
    %322 = vmatpush.msra.mxu0 %v225
    %323 = vmatpush.msra.mxu0 %v223
    %324 = vmatpush.msra.mxu0 %v221
    %325 = vmatpush.msra.mxu0 %v219
    %326 = vmatpush.msra.mxu0 %v217
    %327 = vmatpush.msra.mxu0 %v215
    %328 = vmatmul.f32.gmra.mxu0 %v181
    %v329 = vpop.f32.mrf.mxu0
    %v330 = vadd.f32 %v310, %v329
    %331 = vdwg.mxu0
    %v332 = vmax.f32 %v290, 0.0
    %v333 = vmax.f32 %v330, 0.0
    %v334 = vld [vmem:[#allocation4] sm:$0xff]
    %v335 = vld [vmem:[#allocation4 + $0x8] sm:$0xff]
    %v336 = vld [vmem:[#allocation4 + $0x10] sm:$0xff]
    %v337 = vld [vmem:[#allocation4 + $0x18] sm:$0xff]
    %v338 = vld [vmem:[#allocation4 + $0x20] sm:$0xff]
    %v339 = vld [vmem:[#allocation4 + $0x28] sm:$0xff]
    %v340 = vld [vmem:[#allocation4 + $0x30] sm:$0xff]
    %v341 = vld [vmem:[#allocation4 + $0x38] sm:$0xff]
    %v342 = vld [vmem:[#allocation4 + $0x40] sm:$0xff]
    %v343 = vld [vmem:[#allocation4 + $0x48] sm:$0xff]
    %v344 = vld [vmem:[#allocation4 + $0x50] sm:$0xff]
    %v345 = vld [vmem:[#allocation4 + $0x58] sm:$0xff]
    %v346 = vld [vmem:[#allocation4 + $0x60] sm:$0xff]
    %v347 = vld [vmem:[#allocation4 + $0x68] sm:$0xff]
    %v348 = vld [vmem:[#allocation4 + $0x70] sm:$0xff]
    %v349 = vld [vmem:[#allocation4 + $0x78] sm:$0xff]
    %v350 = vld [vmem:[#allocation4 + $0x80] sm:$0xff]
    %v351 = vld [vmem:[#allocation4 + $0x88] sm:$0xff]
    %v352 = vld [vmem:[#allocation4 + $0x90] sm:$0xff]
    %v353 = vld [vmem:[#allocation4 + $0x98] sm:$0xff]
    %v354 = vld [vmem:[#allocation4 + $0xa0] sm:$0xff]
    %v355 = vld [vmem:[#allocation4 + $0xa8] sm:$0xff]
    %v356 = vld [vmem:[#allocation4 + $0xb0] sm:$0xff]
    %v357 = vld [vmem:[#allocation4 + $0xb8] sm:$0xff]
    %v358 = vld [vmem:[#allocation4 + $0xc0] sm:$0xff]
    %v359 = vld [vmem:[#allocation4 + $0xc8] sm:$0xff]
    %v360 = vld [vmem:[#allocation4 + $0xd0] sm:$0xff]
    %v361 = vld [vmem:[#allocation4 + $0xd8] sm:$0xff]
    %v362 = vld [vmem:[#allocation4 + $0xe0] sm:$0xff]
    %v363 = vld [vmem:[#allocation4 + $0xe8] sm:$0xff]
    %v364 = vld [vmem:[#allocation4 + $0xf0] sm:$0xff]
    %v365 = vld [vmem:[#allocation4 + $0xf8] sm:$0xff]
    %v366 = vld [vmem:[%s8] sm:$0x1]
    %v368 = vperm.slane %v366, 0
    %370 = vmatpush.msra.mxu0 %v349
    %371 = vmatpush.msra.mxu0 %v348
    %372 = vmatpush.msra.mxu0 %v347
    %373 = vmatpush.msra.mxu0 %v346
    %374 = vmatpush.msra.mxu0 %v345
    %375 = vmatpush.msra.mxu0 %v344
    %376 = vmatpush.msra.mxu0 %v343
    %377 = vmatpush.msra.mxu0 %v342
    %378 = vmatpush.msra.mxu0 %v341
    %379 = vmatpush.msra.mxu0 %v340
    %380 = vmatpush.msra.mxu0 %v339
    %381 = vmatpush.msra.mxu0 %v338
    %382 = vmatpush.msra.mxu0 %v337
    %383 = vmatpush.msra.mxu0 %v336
    %384 = vmatpush.msra.mxu0 %v335
    %385 = vmatpush.msra.mxu0 %v334
    %386 = vmatmul.f32.gmra.mxu0 %v332
    %v387 = vpop.f32.mrf.mxu0
    %v388 = vadd.f32 %v368, %v387
    %389 = vdwg.mxu0
    %390 = vmatpush.msra.mxu0 %v365
    %391 = vmatpush.msra.mxu0 %v364
    %392 = vmatpush.msra.mxu0 %v363
    %393 = vmatpush.msra.mxu0 %v362
    %394 = vmatpush.msra.mxu0 %v361
    %395 = vmatpush.msra.mxu0 %v360
    %396 = vmatpush.msra.mxu0 %v359
    %397 = vmatpush.msra.mxu0 %v358
    %398 = vmatpush.msra.mxu0 %v357
    %399 = vmatpush.msra.mxu0 %v356
    %400 = vmatpush.msra.mxu0 %v355
    %401 = vmatpush.msra.mxu0 %v354
    %402 = vmatpush.msra.mxu0 %v353
    %403 = vmatpush.msra.mxu0 %v352
    %404 = vmatpush.msra.mxu0 %v351
    %405 = vmatpush.msra.mxu0 %v350
    %406 = vmatmul.f32.gmra.mxu0 %v333
    %v407 = vpop.f32.mrf.mxu0
    %v408 = vadd.f32 %v388, %v407
    %409 = vdwg.mxu0
    %v410 = vmax.f32 %v408, 0.0
    %v411 = vld [vmem:[%s9] sm:$0xff]
    %v412 = vld [vmem:[%s9 + $0x8] sm:$0xff]
    %v413 = vld [vmem:[%s9 + $0x10] sm:$0xff]
    %v414 = vld [vmem:[%s9 + $0x18] sm:$0xff]
    %v415 = vld [vmem:[%s9 + $0x20] sm:$0xff]
    %v416 = vld [vmem:[%s9 + $0x28] sm:$0xff]
    %v417 = vld [vmem:[%s9 + $0x30] sm:$0xff]
    %v418 = vld [vmem:[%s9 + $0x38] sm:$0xff]
    %v419 = vld [vmem:[%s9 + $0x40] sm:$0xff]
    %v420 = vld [vmem:[%s9 + $0x48] sm:$0xff]
    %v421 = vld [vmem:[%s9 + $0x50] sm:$0xff]
    %v422 = vld [vmem:[%s9 + $0x58] sm:$0xff]
    %v423 = vld [vmem:[%s9 + $0x60] sm:$0xff]
    %v424 = vld [vmem:[%s9 + $0x68] sm:$0xff]
    %v425 = vld [vmem:[%s9 + $0x70] sm:$0xff]
    %v426 = vld [vmem:[%s9 + $0x78] sm:$0xff]
    %v427 = vld [vmem:[%s10] sm:$0x1]
    %v429 = vperm.slane %v427, 0
    %431 = vmatpush.msra.mxu0 %v426
    %432 = vmatpush.msra.mxu0 %v425
    %433 = vmatpush.msra.mxu0 %v424
    %434 = vmatpush.msra.mxu0 %v423
    %435 = vmatpush.msra.mxu0 %v422
    %436 = vmatpush.msra.mxu0 %v421
    %437 = vmatpush.msra.mxu0 %v420
    %438 = vmatpush.msra.mxu0 %v419
    %439 = vmatpush.msra.mxu0 %v418
    %440 = vmatpush.msra.mxu0 %v417
    %441 = vmatpush.msra.mxu0 %v416
    %442 = vmatpush.msra.mxu0 %v415
    %443 = vmatpush.msra.mxu0 %v414
    %444 = vmatpush.msra.mxu0 %v413
    %445 = vmatpush.msra.mxu0 %v412
    %446 = vmatpush.msra.mxu0 %v411
    %447 = vmatmul.f32.gmra.mxu0 %v410
    %v448 = vpop.f32.mrf.mxu0
    %v449 = vadd.f32 %v429, %v448
    %450 = vdwg.mxu0
    %451 = vst [vmem:[%s11] sm:$0xff] %v449
    // Predicated region
    $region54: #{dqn_forward.1} parent=1 // pred_check
      _
    $region55: #{dqn_forward.1} parent=1 // pred_check_branch
      %453 = sbr.rel (0) target = $region57
    $region56: #{dqn_forward.1} parent=1 // pred_region
      _
    $region57: #{dqn_forward.1} parent=1 // pred_fallthru
      _
    // Predicated region
    $region58: #{dqn_forward.1} parent=1 // pred_check
      _
    $region59: #{dqn_forward.1} parent=1 // pred_check_branch
      %455 = sbr.rel (0) target = $region61
    $region60: #{dqn_forward.1} parent=1 // pred_region
      _
    $region61: #{dqn_forward.1} parent=1 // pred_fallthru
      _
    %456 = vsyncpa [#allocation3], 1
    %457 = vsyncpa [#allocation5], 1

</llo_original>
